<compile_context>
chip_gen: v7x
topology: tpu7x:2x2x1
jax: 0.10.0
libtpu: 0.0.40
codegen_flags: <defaults>
</compile_context>

<pallas_src>
import functools

import jax
import jax.numpy as jnp
from jax.experimental import pallas as pl
from jax.experimental.pallas import tpu as pltpu


def _round_up(x, m):
    return (x + m - 1) // m * m


# -----------------------------------------------------------------------------
# Fused kernel: all ConvBlocks for one (batch element, time tile).
#   x_hbm   : (B, T_total, Dp)        zero-padded input, left in HBM (pl.ANY)
#   w_ref   : (n_blocks, K*Dp, Dp)    im2col conv weights (resident in VMEM)
#   cb_ref  : (n_blocks, 1, Dp)       conv bias
#   g_ref   : (n_blocks, 1, Dp)       layernorm gamma (padded lanes = 0)
#   b_ref   : (n_blocks, 1, Dp)       layernorm beta  (padded lanes = 0)
#   o_ref   : (1, tile_t, Dp)         output tile
#   xwin_ref: (W0p, Dp) VMEM scratch  input window (tile + halo)
#   dma_sem : DMA semaphore
# -----------------------------------------------------------------------------
def conv_stack_kernel(x_hbm, w_ref, cb_ref, g_ref, b_ref, o_ref,
                      xwin_ref, dma_sem, *,
                      n_blocks, ksize, tile_t, seq_len, d_real, eps):
    pad = (ksize - 1) // 2
    halo = n_blocks * pad
    w0 = tile_t + 2 * halo                       # rows actually used this step

    b = pl.program_id(0)
    t = pl.program_id(1)
    start = pl.multiple_of(t * tile_t, 8)

    # Fetch the input window (time tile + conv halo) for this (batch, tile).
    cp = pltpu.make_async_copy(
        x_hbm.at[b, pl.ds(start, xwin_ref.shape[0]), :], xwin_ref, dma_sem)
    cp.start()
    cp.wait()

    cur = xwin_ref[...][:w0, :]                  # (w0, Dp), compute dtype
    cdtype = cur.dtype
    inv_d = 1.0 / float(d_real)

    for i in range(n_blocks):
        w_cur = tile_t + 2 * (n_blocks - i) * pad
        w_out = w_cur - 2 * pad

        # Activation (ReLU). Dropout(0.1) is identity in eval mode.
        # TODO(synk): training-mode dropout is not modeled (inference only).
        a = jnp.maximum(cur, jnp.array(0, dtype=cur.dtype))

        if i > 0:
            # Zero rows outside the real sequence so this conv sees the same
            # zero padding at the true sequence boundaries as PyTorch.
            row = jax.lax.broadcasted_iota(jnp.int32, (w_cur, 1), 0)
            gidx = row + (start + (i * pad - halo))
            valid = jnp.logical_and(gidx >= 0, gidx < seq_len)
            a = jnp.where(valid, a, jnp.array(0, dtype=a.dtype))

        # Conv1d as ONE im2col MXU matmul: (w_out, K*Dp) @ (K*Dp, Dp).
        a2 = jnp.concatenate([a[k:k + w_out, :] for k in range(ksize)], axis=1)
        y = jnp.dot(a2, w_ref[i], preferred_element_type=jnp.float32)
        y = y + cb_ref[i]

        # One-pass LayerNorm over the real d_real channels (padded lanes of y
        # are exactly zero, so they contribute nothing to either sum).
        s1 = jnp.sum(y, axis=-1, keepdims=True)
        s2 = jnp.sum(y * y, axis=-1, keepdims=True)
        mean = s1 * inv_d
        var = jnp.maximum(s2 * inv_d - mean * mean, 0.0)
        yhat = (y - mean) * jax.lax.rsqrt(var + eps)
        cur = (yhat * g_ref[i] + b_ref[i]).astype(cdtype)

    o_ref[0] = cur.astype(o_ref.dtype)


def conv_stack_pallas(x_bdt, params, *, kernel_size, eps=1e-5,
                      tile_t=512, compute_dtype=jnp.float32):
    """ConvStack forward. x_bdt: (B, D, T) (PyTorch NCW layout)."""
    assert kernel_size % 2 == 1, \
        "only odd kernel_size matches PyTorch 'same' padding (K-1)//2"
    B, D, T = x_bdt.shape
    n_blocks = len(params)
    K = kernel_size
    pad = (K - 1) // 2
    halo = n_blocks * pad

    d_pad = _round_up(max(D, 128), 128)                 # lane-dense hidden dim
    tile = _round_up(min(tile_t, _round_up(T, 8)), 8)   # time tile (mult of 8)
    n_tiles = pl.cdiv(T, tile)
    t_round = n_tiles * tile
    w0 = tile + 2 * halo                                # window rows used
    w0p = _round_up(w0, 8)                              # window rows fetched
    t_total = (n_tiles - 1) * tile + w0p                # padded time length

    # Channels-last, lane-padded, halo-padded input. Everything outside the
    # real (T, D) region is zero; ReLU(0) = 0 gives block 0 its zero padding.
    x_btd = jnp.transpose(x_bdt, (0, 2, 1)).astype(compute_dtype)
    x_padded = jnp.pad(x_btd,
                       ((0, 0), (halo, t_total - halo - T), (0, d_pad - D)))

    # Pack per-block parameters, zero-padded out to d_pad lanes.
    w_all, cb_all, g_all, b_all = [], [], [], []
    for p in params:
        # PyTorch Conv1d weight (out, in, K) -> (K, in, out) -> (K*Dp, Dp).
        w_kio = jnp.transpose(p["conv_w"], (2, 1, 0))
        w_kio = jnp.pad(w_kio, ((0, 0), (0, d_pad - D), (0, d_pad - D)))
        w_all.append(w_kio.reshape(K * d_pad, d_pad).astype(compute_dtype))
        cb_all.append(jnp.pad(p["conv_b"], (0, d_pad - D)).astype(jnp.float32))
        g_all.append(jnp.pad(p["ln_g"], (0, d_pad - D)).astype(jnp.float32))
        b_all.append(jnp.pad(p["ln_b"], (0, d_pad - D)).astype(jnp.float32))
    w_all = jnp.stack(w_all)                            # (n_blocks, K*Dp, Dp)
    cb_all = jnp.stack(cb_all)[:, None, :]              # (n_blocks, 1, Dp)
    g_all = jnp.stack(g_all)[:, None, :]
    b_all = jnp.stack(b_all)[:, None, :]

    kern = functools.partial(
        conv_stack_kernel, n_blocks=n_blocks, ksize=K, tile_t=tile,
        seq_len=T, d_real=D, eps=eps)

    out_padded = pl.pallas_call(
        kern,
        out_shape=jax.ShapeDtypeStruct((B, t_round, d_pad), x_bdt.dtype),
        grid=(B, n_tiles),
        in_specs=[
            pl.BlockSpec(memory_space=pl.ANY),                           # x (HBM)
            pl.BlockSpec((n_blocks, K * d_pad, d_pad), lambda b, t: (0, 0, 0)),
            pl.BlockSpec((n_blocks, 1, d_pad), lambda b, t: (0, 0, 0)),
            pl.BlockSpec((n_blocks, 1, d_pad), lambda b, t: (0, 0, 0)),
            pl.BlockSpec((n_blocks, 1, d_pad), lambda b, t: (0, 0, 0)),
        ],
        out_specs=pl.BlockSpec((1, tile, d_pad), lambda b, t: (b, t, 0)),
        scratch_shapes=[
            pltpu.VMEM((w0p, d_pad), compute_dtype),
            pltpu.SemaphoreType.DMA(()),
        ],
        compiler_params=pltpu.CompilerParams(
            dimension_semantics=("parallel", "parallel")),
    )(x_padded, w_all, cb_all, g_all, b_all)

    return jnp.transpose(out_padded[:, :T, :D], (0, 2, 1))   # back to (B, D, T)


# -----------------------------------------------------------------------------
# Pure-JAX reference (mirrors the PyTorch module) for correctness checking.
# -----------------------------------------------------------------------------
def ref_block(x_bdt, conv_w, conv_b, ln_g, ln_b, kernel_size, eps=1e-5):
    a = jnp.maximum(x_bdt, 0.0)
    pad = (kernel_size - 1) // 2
    y = jax.lax.conv_general_dilated(
        a, conv_w, window_strides=(1,), padding=[(pad, pad)],
        dimension_numbers=("NCH", "OIH", "NCH"))
    y = y + conv_b[None, :, None]
    y = jnp.transpose(y, (0, 2, 1))
    mean = y.mean(-1, keepdims=True)
    var = ((y - mean) ** 2).mean(-1, keepdims=True)
    y = (y - mean) / jnp.sqrt(var + eps) * ln_g + ln_b
    return jnp.transpose(y, (0, 2, 1))


def ref_stack(x, params, kernel_size):
    for p in params:
        x = ref_block(x, p["conv_w"], p["conv_b"], p["ln_g"], p["ln_b"],
                      kernel_size)
    return x


def _make_params(key, n_blocks, D, K):
    params = []
    keys = jax.random.split(key, 2 * n_blocks)
    for i in range(n_blocks):
        params.append(dict(
            conv_w=jax.random.normal(keys[2 * i], (D, D, K), jnp.float32) * 0.1,
            conv_b=jax.random.normal(keys[2 * i + 1], (D,), jnp.float32) * 0.1,
            ln_g=jnp.ones((D,), jnp.float32),
            ln_b=jnp.zeros((D,), jnp.float32),
        ))
    return params


if __name__ == "__main__":
    key = jax.random.PRNGKey(0)
    k1, k2, k3, k4 = jax.random.split(key, 4)

    # Config 1: hidden_size=32, n_blocks=2, kernel_size=3, activation="ReLU".
    # tile_t=8 forces multiple time tiles so the halo/mask path is exercised.
    B, D, T, K, NB = 2, 32, 16, 3, 2
    x1 = jax.random.normal(k1, (B, D, T), jnp.float32)
    p1 = _make_params(k2, NB, D, K)
    out1 = jax.block_until_ready(
        conv_stack_pallas(x1, p1, kernel_size=K, tile_t=8))
    ref1 = ref_stack(x1, p1, K)
    assert out1.shape == (B, D, T)
    assert jnp.allclose(out1, ref1, atol=2e-4, rtol=2e-4), "config-1 mismatch"

    # Config 2: ragged sizes (D not mult. of 128, T not mult. of tile, K=5).
    B2, D2, T2, K2, NB2 = 1, 20, 13, 5, 3
    x2 = jax.random.normal(k3, (B2, D2, T2), jnp.float32)
    p2 = _make_params(k4, NB2, D2, K2)
    out2 = jax.block_until_ready(
        conv_stack_pallas(x2, p2, kernel_size=K2, tile_t=8))
    ref2 = ref_stack(x2, p2, K2)
    assert out2.shape == (B2, D2, T2)
    assert jnp.allclose(out2, ref2, atol=2e-4, rtol=2e-4), "config-2 mismatch"

    print("KERNEL_OK")
</pallas_src>

<mosaic_0001>
module attributes {stable_mosaic.version = 11 : i64} {
  func.func @conv_stack_kernel(%arg0: i32, %arg1: i32, %arg2: memref<2x24x128xf32, #tpu.memory_space<any>>, %arg3: memref<2x384x128xf32, #tpu.memory_space<vmem>>, %arg4: memref<2x1x128xf32, #tpu.memory_space<vmem>>, %arg5: memref<2x1x128xf32, #tpu.memory_space<vmem>>, %arg6: memref<2x1x128xf32, #tpu.memory_space<vmem>>, %arg7: memref<1x8x128xf32, #tpu.memory_space<vmem>>, %arg8: memref<16x128xf32, #tpu.memory_space<vmem>>, %arg9: memref<!tpu.dma_semaphore, #tpu.memory_space<semaphore_mem>>) attributes {dimension_semantics = [#tpu.dimension_semantics<parallel>, #tpu.dimension_semantics<parallel>], iteration_bounds = array<i64: 2, 2>, scalar_prefetch = 0 : i64, scratch_operands = 2 : i64, tpu.core_type = #tpu.core_type<tc>, window_params = [{}, {pipeline_mode = #tpu.pipeline_mode<synchronous>, transform_indices = @transform_1, window_bounds = array<i64: 2, 384, 128>}, {pipeline_mode = #tpu.pipeline_mode<synchronous>, transform_indices = @transform_2, window_bounds = array<i64: 2, 1, 128>}, {pipeline_mode = #tpu.pipeline_mode<synchronous>, transform_indices = @transform_3, window_bounds = array<i64: 2, 1, 128>}, {pipeline_mode = #tpu.pipeline_mode<synchronous>, transform_indices = @transform_4, window_bounds = array<i64: 2, 1, 128>}, {transform_indices = @transform_5, window_bounds = array<i64: 1, 8, 128>}]} {
    %c8_i32 = arith.constant 8 : i32
    %0 = arith.muli %arg1, %c8_i32 : i32
    %1 = tpu.assume_multiple %0, 8 : i32
    %c0_i32 = arith.constant 0 : i32
    %2 = tpu.memref_slice %arg2[%arg0, %1, %c0_i32] : memref<2x24x128xf32, #tpu.memory_space<any>> -> memref<1x16x128xf32, #tpu.memory_space<any>>
    %3 = tpu.memref_squeeze %2 : memref<1x16x128xf32, #tpu.memory_space<any>> -> memref<16x128xf32, #tpu.memory_space<any>>
    tpu.enqueue_dma source(%3 : memref<16x128xf32, #tpu.memory_space<any>>) target(%arg8 : memref<16x128xf32, #tpu.memory_space<vmem>>) target_semaphore(%arg9 : memref<!tpu.dma_semaphore, #tpu.memory_space<semaphore_mem>>)
    %c0_i32_0 = arith.constant 0 : i32
    %4 = tpu.memref_slice %arg2[%arg0, %1, %c0_i32_0] : memref<2x24x128xf32, #tpu.memory_space<any>> -> memref<1x16x128xf32, #tpu.memory_space<any>>
    %5 = tpu.memref_squeeze %4 : memref<1x16x128xf32, #tpu.memory_space<any>> -> memref<16x128xf32, #tpu.memory_space<any>>
    tpu.wait_dma2 semaphore(%arg9 : memref<!tpu.dma_semaphore, #tpu.memory_space<semaphore_mem>>) src(%5 : memref<16x128xf32, #tpu.memory_space<any>>) dst(%arg8 : memref<16x128xf32, #tpu.memory_space<vmem>>)
    %c0 = arith.constant 0 : index
    %c0_1 = arith.constant 0 : index
    %6 = vector.load %arg8[%c0, %c0_1] : memref<16x128xf32, #tpu.memory_space<vmem>>, vector<16x128xf32>
    %7 = vector.extract_strided_slice %6 {offsets = [0, 0], sizes = [12, 128], strides = [1, 1]} : vector<16x128xf32> to vector<12x128xf32>
    %cst = arith.constant 0.000000e+00 : f32
    %8 = vector.broadcast %cst : f32 to vector<12x128xf32>
    %9 = arith.maximumf %7, %8 : vector<12x128xf32>
    %10 = vector.extract_strided_slice %9 {offsets = [0, 0], sizes = [10, 128], strides = [1, 1]} : vector<12x128xf32> to vector<10x128xf32>
    %11 = vector.extract_strided_slice %9 {offsets = [1, 0], sizes = [10, 128], strides = [1, 1]} : vector<12x128xf32> to vector<10x128xf32>
    %12 = vector.extract_strided_slice %9 {offsets = [2, 0], sizes = [10, 128], strides = [1, 1]} : vector<12x128xf32> to vector<10x128xf32>
    %13 = tpu.concatenate %10, %11, %12 in 1 : vector<10x128xf32>, vector<10x128xf32>, vector<10x128xf32> -> vector<10x384xf32>
    %c0_2 = arith.constant 0 : index
    %c0_3 = arith.constant 0 : index
    %c0_4 = arith.constant 0 : index
    %14 = vector.load %arg3[%c0_2, %c0_3, %c0_4] : memref<2x384x128xf32, #tpu.memory_space<vmem>>, vector<1x384x128xf32>
    %15 = vector.shape_cast %14 : vector<1x384x128xf32> to vector<384x128xf32>
    %cst_5 = arith.constant dense<0.000000e+00> : vector<10x128xf32>
    %16 = tpu.matmul %13, %15, %cst_5 {dimension_numbers = #tpu.dot_dimension_numbers<[1], [0], [0], [1], [0, 0, 1, 1], [], []>} : vector<10x384xf32>, vector<384x128xf32>, vector<10x128xf32> -> vector<10x128xf32>
    %c0_6 = arith.constant 0 : index
    %c0_7 = arith.constant 0 : index
    %c0_8 = arith.constant 0 : index
    %17 = vector.load %arg4[%c0_6, %c0_7, %c0_8] : memref<2x1x128xf32, #tpu.memory_space<vmem>>, vector<1x1x128xf32>
    %18 = vector.shape_cast %17 : vector<1x1x128xf32> to vector<1x128xf32>
    %19 = vector.broadcast %18 : vector<1x128xf32> to vector<10x128xf32>
    %20 = arith.addf %16, %19 : vector<10x128xf32>
    %cst_9 = arith.constant dense<0.000000e+00> : vector<10xf32>
    %21 = vector.multi_reduction <add>, %20, %cst_9 [1] : vector<10x128xf32> to vector<10xf32>
    %22 = vector.shape_cast %21 : vector<10xf32> to vector<10x1xf32>
    %23 = arith.mulf %20, %20 : vector<10x128xf32>
    %cst_10 = arith.constant dense<0.000000e+00> : vector<10xf32>
    %24 = vector.multi_reduction <add>, %23, %cst_10 [1] : vector<10x128xf32> to vector<10xf32>
    %25 = vector.shape_cast %24 : vector<10xf32> to vector<10x1xf32>
    %cst_11 = arith.constant 3.125000e-02 : f32
    %26 = vector.broadcast %cst_11 : f32 to vector<10x1xf32>
    %27 = arith.mulf %22, %26 : vector<10x1xf32>
    %cst_12 = arith.constant 3.125000e-02 : f32
    %28 = vector.broadcast %cst_12 : f32 to vector<10x1xf32>
    %29 = arith.mulf %25, %28 : vector<10x1xf32>
    %30 = arith.mulf %27, %27 : vector<10x1xf32>
    %31 = arith.subf %29, %30 : vector<10x1xf32>
    %cst_13 = arith.constant 0.000000e+00 : f32
    %32 = vector.broadcast %cst_13 : f32 to vector<10x1xf32>
    %33 = arith.maximumf %31, %32 : vector<10x1xf32>
    %34 = vector.broadcast %27 : vector<10x1xf32> to vector<10x128xf32>
    %35 = arith.subf %20, %34 : vector<10x128xf32>
    %cst_14 = arith.constant 9.99999974E-6 : f32
    %36 = vector.broadcast %cst_14 : f32 to vector<10x1xf32>
    %37 = arith.addf %33, %36 : vector<10x1xf32>
    %38 = math.rsqrt %37 : vector<10x1xf32>
    %39 = vector.broadcast %38 : vector<10x1xf32> to vector<10x128xf32>
    %40 = arith.mulf %35, %39 : vector<10x128xf32>
    %c0_15 = arith.constant 0 : index
    %c0_16 = arith.constant 0 : index
    %c0_17 = arith.constant 0 : index
    %41 = vector.load %arg5[%c0_15, %c0_16, %c0_17] : memref<2x1x128xf32, #tpu.memory_space<vmem>>, vector<1x1x128xf32>
    %42 = vector.shape_cast %41 : vector<1x1x128xf32> to vector<1x128xf32>
    %43 = vector.broadcast %42 : vector<1x128xf32> to vector<10x128xf32>
    %44 = arith.mulf %40, %43 : vector<10x128xf32>
    %c0_18 = arith.constant 0 : index
    %c0_19 = arith.constant 0 : index
    %c0_20 = arith.constant 0 : index
    %45 = vector.load %arg6[%c0_18, %c0_19, %c0_20] : memref<2x1x128xf32, #tpu.memory_space<vmem>>, vector<1x1x128xf32>
    %46 = vector.shape_cast %45 : vector<1x1x128xf32> to vector<1x128xf32>
    %47 = vector.broadcast %46 : vector<1x128xf32> to vector<10x128xf32>
    %48 = arith.addf %44, %47 : vector<10x128xf32>
    %cst_21 = arith.constant 0.000000e+00 : f32
    %49 = vector.broadcast %cst_21 : f32 to vector<10x128xf32>
    %50 = arith.maximumf %48, %49 : vector<10x128xf32>
    %51 = tpu.iota {dimensions = array<i32: 0>} : vector<10x1xi32>
    %c-1_i32 = arith.constant -1 : i32
    %52 = arith.addi %1, %c-1_i32 : i32
    %53 = vector.broadcast %52 : i32 to vector<10x1xi32>
    %54 = arith.addi %51, %53 : vector<10x1xi32>
    %c0_i32_22 = arith.constant 0 : i32
    %55 = vector.broadcast %c0_i32_22 : i32 to vector<10x1xi32>
    %56 = arith.cmpi sge, %54, %55 : vector<10x1xi32>
    %c16_i32 = arith.constant 16 : i32
    %57 = vector.broadcast %c16_i32 : i32 to vector<10x1xi32>
    %58 = arith.cmpi slt, %54, %57 : vector<10x1xi32>
    %59 = arith.andi %56, %58 : vector<10x1xi1>
    %cst_23 = arith.constant 0.000000e+00 : f32
    %60 = vector.shape_cast %59 : vector<10x1xi1> to vector<10x1xi1>
    %61 = vector.broadcast %60 : vector<10x1xi1> to vector<10x128xi1>
    %62 = vector.broadcast %cst_23 : f32 to vector<10x128xf32>
    %63 = arith.select %61, %50, %62 : vector<10x128xi1>, vector<10x128xf32>
    %64 = vector.extract_strided_slice %63 {offsets = [0, 0], sizes = [8, 128], strides = [1, 1]} : vector<10x128xf32> to vector<8x128xf32>
    %65 = vector.extract_strided_slice %63 {offsets = [1, 0], sizes = [8, 128], strides = [1, 1]} : vector<10x128xf32> to vector<8x128xf32>
    %66 = vector.extract_strided_slice %63 {offsets = [2, 0], sizes = [8, 128], strides = [1, 1]} : vector<10x128xf32> to vector<8x128xf32>
    %67 = tpu.concatenate %64, %65, %66 in 1 : vector<8x128xf32>, vector<8x128xf32>, vector<8x128xf32> -> vector<8x384xf32>
    %c1 = arith.constant 1 : index
    %c0_24 = arith.constant 0 : index
    %c0_25 = arith.constant 0 : index
    %68 = vector.load %arg3[%c1, %c0_24, %c0_25] : memref<2x384x128xf32, #tpu.memory_space<vmem>>, vector<1x384x128xf32>
    %69 = vector.shape_cast %68 : vector<1x384x128xf32> to vector<384x128xf32>
    %cst_26 = arith.constant dense<0.000000e+00> : vector<8x128xf32>
    %70 = tpu.matmul %67, %69, %cst_26 {dimension_numbers = #tpu.dot_dimension_numbers<[1], [0], [0], [1], [0, 0, 1, 1], [], []>} : vector<8x384xf32>, vector<384x128xf32>, vector<8x128xf32> -> vector<8x128xf32>
    %c1_27 = arith.constant 1 : index
    %c0_28 = arith.constant 0 : index
    %c0_29 = arith.constant 0 : index
    %71 = vector.load %arg4[%c1_27, %c0_28, %c0_29] : memref<2x1x128xf32, #tpu.memory_space<vmem>>, vector<1x1x128xf32>
    %72 = vector.shape_cast %71 : vector<1x1x128xf32> to vector<1x128xf32>
    %73 = vector.broadcast %72 : vector<1x128xf32> to vector<8x128xf32>
    %74 = arith.addf %70, %73 : vector<8x128xf32>
    %cst_30 = arith.constant dense<0.000000e+00> : vector<8xf32>
    %75 = vector.multi_reduction <add>, %74, %cst_30 [1] : vector<8x128xf32> to vector<8xf32>
    %76 = vector.shape_cast %75 : vector<8xf32> to vector<8x1xf32>
    %77 = arith.mulf %74, %74 : vector<8x128xf32>
    %cst_31 = arith.constant dense<0.000000e+00> : vector<8xf32>
    %78 = vector.multi_reduction <add>, %77, %cst_31 [1] : vector<8x128xf32> to vector<8xf32>
    %79 = vector.shape_cast %78 : vector<8xf32> to vector<8x1xf32>
    %cst_32 = arith.constant 3.125000e-02 : f32
    %80 = vector.broadcast %cst_32 : f32 to vector<8x1xf32>
    %81 = arith.mulf %76, %80 : vector<8x1xf32>
    %cst_33 = arith.constant 3.125000e-02 : f32
    %82 = vector.broadcast %cst_33 : f32 to vector<8x1xf32>
    %83 = arith.mulf %79, %82 : vector<8x1xf32>
    %84 = arith.mulf %81, %81 : vector<8x1xf32>
    %85 = arith.subf %83, %84 : vector<8x1xf32>
    %cst_34 = arith.constant 0.000000e+00 : f32
    %86 = vector.broadcast %cst_34 : f32 to vector<8x1xf32>
    %87 = arith.maximumf %85, %86 : vector<8x1xf32>
    %88 = vector.broadcast %81 : vector<8x1xf32> to vector<8x128xf32>
    %89 = arith.subf %74, %88 : vector<8x128xf32>
    %cst_35 = arith.constant 9.99999974E-6 : f32
    %90 = vector.broadcast %cst_35 : f32 to vector<8x1xf32>
    %91 = arith.addf %87, %90 : vector<8x1xf32>
    %92 = math.rsqrt %91 : vector<8x1xf32>
    %93 = vector.broadcast %92 : vector<8x1xf32> to vector<8x128xf32>
    %94 = arith.mulf %89, %93 : vector<8x128xf32>
    %c1_36 = arith.constant 1 : index
    %c0_37 = arith.constant 0 : index
    %c0_38 = arith.constant 0 : index
    %95 = vector.load %arg5[%c1_36, %c0_37, %c0_38] : memref<2x1x128xf32, #tpu.memory_space<vmem>>, vector<1x1x128xf32>
    %96 = vector.shape_cast %95 : vector<1x1x128xf32> to vector<1x128xf32>
    %97 = vector.broadcast %96 : vector<1x128xf32> to vector<8x128xf32>
    %98 = arith.mulf %94, %97 : vector<8x128xf32>
    %c1_39 = arith.constant 1 : index
    %c0_40 = arith.constant 0 : index
    %c0_41 = arith.constant 0 : index
    %99 = vector.load %arg6[%c1_39, %c0_40, %c0_41] : memref<2x1x128xf32, #tpu.memory_space<vmem>>, vector<1x1x128xf32>
    %100 = vector.shape_cast %99 : vector<1x1x128xf32> to vector<1x128xf32>
    %101 = vector.broadcast %100 : vector<1x128xf32> to vector<8x128xf32>
    %102 = arith.addf %98, %101 : vector<8x128xf32>
    %c0_42 = arith.constant 0 : index
    %c0_43 = arith.constant 0 : index
    %c0_44 = arith.constant 0 : index
    %103 = vector.load %arg7[%c0_42, %c0_43, %c0_44] : memref<1x8x128xf32, #tpu.memory_space<vmem>>, vector<1x8x128xf32>
    %104 = vector.shape_cast %103 : vector<1x8x128xf32> to vector<8x128xf32>
    %105 = vector.shape_cast %102 : vector<8x128xf32> to vector<1x8x128xf32>
    tpu.vector_store %arg7[%c0_42, %c0_43, %c0_44], %105 {strides = array<i32>} : memref<1x8x128xf32, #tpu.memory_space<vmem>>, vector<1x8x128xf32>,
    return
  }
  func.func @transform_1(%arg0: i32, %arg1: i32) -> (i32, i32, i32) {
    %c0_i32 = arith.constant 0 : i32
    %c0_i32_0 = arith.constant 0 : i32
    %c0_i32_1 = arith.constant 0 : i32
    %c0_i32_2 = arith.constant 0 : i32
    return %c0_i32, %c0_i32_0, %c0_i32_1 : i32, i32, i32
  }
  func.func @transform_2(%arg0: i32, %arg1: i32) -> (i32, i32, i32) {
    %c0_i32 = arith.constant 0 : i32
    %c0_i32_0 = arith.constant 0 : i32
    %c0_i32_1 = arith.constant 0 : i32
    %c0_i32_2 = arith.constant 0 : i32
    return %c0_i32, %c0_i32_0, %c0_i32_1 : i32, i32, i32
  }
  func.func @transform_3(%arg0: i32, %arg1: i32) -> (i32, i32, i32) {
    %c0_i32 = arith.constant 0 : i32
    %c0_i32_0 = arith.constant 0 : i32
    %c0_i32_1 = arith.constant 0 : i32
    %c0_i32_2 = arith.constant 0 : i32
    return %c0_i32, %c0_i32_0, %c0_i32_1 : i32, i32, i32
  }
  func.func @transform_4(%arg0: i32, %arg1: i32) -> (i32, i32, i32) {
    %c0_i32 = arith.constant 0 : i32
    %c0_i32_0 = arith.constant 0 : i32
    %c0_i32_1 = arith.constant 0 : i32
    %c0_i32_2 = arith.constant 0 : i32
    return %c0_i32, %c0_i32_0, %c0_i32_1 : i32, i32, i32
  }
  func.func @transform_5(%arg0: i32, %arg1: i32) -> (i32, i32, i32) {
    %c0_i32 = arith.constant 0 : i32
    %c0_i32_0 = arith.constant 0 : i32
    return %arg0, %arg1, %c0_i32 : i32, i32, i32
  }
}

</mosaic_0001>

<llo_original>
// kernel: tpu_custom_call.1
$region0: #{tpu_custom_call.1}
  #allocation0 [shape = 'u32[]', space=smem, size = 0x4, offset = 0x4, fixed_abs, tag = 'smem constant byte address 0x4 - core index']
  #allocation1 [shape = 'u32[144,128]{1,0:T(1,128)}', space=vmem, size = 0x12000, scoped, tag = 'internal scratch']
  #allocation2 [shape = 'f32[16,128]{1,0:T(8,128)}', space=vmem, size = 0x2000, scoped, tag = 'scratch operand']
  #allocation3 [shape = 's32[1]{0}', space=sflag, size = 0x4, scoped, tag = 'scratch operand']
  #allocation8 [shape = 's32[]', space=sflag, size = 0x4, offset = 0, fixed_abs, tag = 'sflag constant byte address 0x0 - dummy sync flag']
  #allocation9 [shape = 's32[]', space=sflag, size = 0x4, offset = 0, fixed_abs, tag = 'sflag constant byte address 0x0 - dummy sync flag']
  #allocation10 [shape = 'u32[]', space=smem, size = 0x4, offset = 0x44, fixed_abs, tag = 'smem constant byte address 0x44 - assertion arg 0']
  #allocation11 [shape = 'u32[]', space=smem, size = 0x4, offset = 0x48, fixed_abs, tag = 'smem constant byte address 0x48 - assertion arg 1']
  %s0 = inlined_call_operand.hbm [shape: f32[2,24,128], index: 0, kind: input, shape index: {}]
  %s1 = inlined_call_operand.hbm [shape: f32[2,384,128], index: 1, kind: input, shape index: {}]
  %s2 = inlined_call_operand.vmem [shape: f32[2,1,128], index: 2, kind: input, shape index: {}]
  %s3 = inlined_call_operand.vmem [shape: f32[2,1,128], index: 3, kind: input, shape index: {}]
  %s4 = inlined_call_operand.vmem [shape: f32[2,1,128], index: 4, kind: input, shape index: {}]
  %s5 = inlined_call_operand.hbm [shape: f32[2,16,128], index: 5, kind: output, shape index: {}]
  %s6 = sld [smem:[#allocation0]]
  $region57: #{tpu_custom_call.1} parent=0
    _
  %s8 = ssub.s32 1, %s6
  %s9 = scalar_select 0, %s8, %s6
  $region1: #{tpu_custom_call.1} parent=0
    #allocation4 [shape = 'u8[393216]{0}', space=vmem, size = 0x60000, scoped, tag = 'input window, operand 1, single buffered']
    #allocation5 [shape = 's32[2]{0}', space=sflag, size = 0x8, scoped, tag = 'scoped memory for tpu_custom_call.1']
    #allocation6 [shape = 's32[2]{0}', space=sflag, size = 0x8, scoped, tag = 'scoped memory for tpu_custom_call.1']
    #allocation7 [shape = 'u8[8192]{0}', space=vmem, size = 0x2000, scoped, tag = 'output window, operand 0']
    %10 = vsyncpa [#allocation5], 0
    %11 = vsyncpa [#allocation6], 0
    %s12 = scalar_lea.sflag [#allocation6], 1
    %13 = vsyncpa %s12, 0
    loop: start=0, step=1, limit=6
    $region2: #{tpu_custom_call.1} parent=1 // loop_pre_header
      _
    $region3: #{tpu_custom_call.1} parent=1 // loop_header
      %s15 = sphi 0, %s19
      %p16 = scmp.ge.s32.totalorder %s15, 6
      %s22 = sphi 0, %s34
      %s23 = sphi 0, %s30
      %s24 = sphi 0, %s22
      %s25 = sphi 0, %s23
      %s26 = sphi 0, %s24
      %s27 = sphi 0, %s25
      %s35 = sphi 0, %s35
      %s37 = sphi 0, %s35
      %s38 = sphi 0, %s37
      %s52 = sphi 0, %s38
      %s56 = sphi 0, %s56
      %s58 = sphi 0, %s56
      %s59 = sphi 0, %s58
      %s73 = sphi 0, %s59
      %s77 = sphi 0, %s77
      %s79 = sphi 0, %s77
      %s80 = sphi 0, %s79
      %s94 = sphi 0, %s80
      %s98 = sphi 0, %s98
      %s100 = sphi 0, %s98
      %s101 = sphi 0, %s100
      %s115 = sphi 0, %s101
      %s123 = sphi 0, %s125
      %s126 = sphi 0, %s123
      %s127 = sphi 0, %s126
      %s143 = sphi 0, %s127
    $region4: #{tpu_custom_call.1} parent=1 // loop_header_branch
      %18 = sbr.rel (%p16) target = $region8
    $region5: #{tpu_custom_call.1} parent=1 // loop_body
      %s20 = ssub.s32 %s15, 1
      %s21 = ssub.s32 %s15, 2
      %s28 = sadd.s32 1, %s23
      %p29 = scmp.ge.s32.totalorder %s28, 2
      %s30 = scalar_select %p29, 0, %s28
      %s31 = sadd.s32 1, %s22
      %s32 = scalar_select %p29, %s31, %s22
      %p33 = scmp.ge.s32.totalorder %s32, 2
      %s34 = scalar_select %p33, 0, %s32
      %s36 = sadd.s32 %s35, 1
      %p39 = scmp.eq.s32.totalorder %s15, 3
      %p40 = scmp.ne.s32.totalorder %s35, %s37
      %p41 = scmp.eq.s32.totalorder %s15, 0
      %p42 = por %p40, %p41
      %p43 = scmp.ne.s32.totalorder %s35, %s37
      %p44 = scmp.eq.s32.totalorder %s20, 3
      %p45 = por %p43, %p44
      %p46 = scmp.ne.s32.totalorder %s37, %s38
      %p47 = scmp.eq.s32.totalorder %s20, 0
      %p48 = por %p46, %p47
      %p49 = scmp.ne.s32.totalorder %s37, %s38
      %p50 = scmp.eq.s32.totalorder %s21, 3
      %p51 = por %p49, %p50
      %p53 = scmp.ne.s32.totalorder %s38, %s52
      %p54 = scmp.eq.s32.totalorder %s21, 0
      %p55 = por %p53, %p54
      %s57 = sadd.s32 %s56, 1
      %p60 = scmp.eq.s32.totalorder %s15, 3
      %p61 = scmp.ne.s32.totalorder %s56, %s58
      %p62 = scmp.eq.s32.totalorder %s15, 0
      %p63 = por %p61, %p62
      %p64 = scmp.ne.s32.totalorder %s56, %s58
      %p65 = scmp.eq.s32.totalorder %s20, 3
      %p66 = por %p64, %p65
      %p67 = scmp.ne.s32.totalorder %s58, %s59
      %p68 = scmp.eq.s32.totalorder %s20, 0
      %p69 = por %p67, %p68
      %p70 = scmp.ne.s32.totalorder %s58, %s59
      %p71 = scmp.eq.s32.totalorder %s21, 3
      %p72 = por %p70, %p71
      %p74 = scmp.ne.s32.totalorder %s59, %s73
      %p75 = scmp.eq.s32.totalorder %s21, 0
      %p76 = por %p74, %p75
      %s78 = sadd.s32 %s77, 1
      %p81 = scmp.eq.s32.totalorder %s15, 3
      %p82 = scmp.ne.s32.totalorder %s77, %s79
      %p83 = scmp.eq.s32.totalorder %s15, 0
      %p84 = por %p82, %p83
      %p85 = scmp.ne.s32.totalorder %s77, %s79
      %p86 = scmp.eq.s32.totalorder %s20, 3
      %p87 = por %p85, %p86
      %p88 = scmp.ne.s32.totalorder %s79, %s80
      %p89 = scmp.eq.s32.totalorder %s20, 0
      %p90 = por %p88, %p89
      %p91 = scmp.ne.s32.totalorder %s79, %s80
      %p92 = scmp.eq.s32.totalorder %s21, 3
      %p93 = por %p91, %p92
      %p95 = scmp.ne.s32.totalorder %s80, %s94
      %p96 = scmp.eq.s32.totalorder %s21, 0
      %p97 = por %p95, %p96
      %s99 = sadd.s32 %s98, 1
      %p102 = scmp.eq.s32.totalorder %s15, 3
      %p103 = scmp.ne.s32.totalorder %s98, %s100
      %p104 = scmp.eq.s32.totalorder %s15, 0
      %p105 = por %p103, %p104
      %p106 = scmp.ne.s32.totalorder %s98, %s100
      %p107 = scmp.eq.s32.totalorder %s20, 3
      %p108 = por %p106, %p107
      %p109 = scmp.ne.s32.totalorder %s100, %s101
      %p110 = scmp.eq.s32.totalorder %s20, 0
      %p111 = por %p109, %p110
      %p112 = scmp.ne.s32.totalorder %s100, %s101
      %p113 = scmp.eq.s32.totalorder %s21, 3
      %p114 = por %p112, %p113
      %p116 = scmp.ne.s32.totalorder %s101, %s115
      %p117 = scmp.eq.s32.totalorder %s21, 0
      %p118 = por %p116, %p117
      %s119 = ssub.s32 %s22, %s34
      %s120 = ssub.s32 %s23, %s30
      %s121 = sor.u32 %s119, %s120
      %p122 = scmp.eq.s32.totalorder %s121, 0
      %s124 = sadd.s32 %s123, 1
      %s125 = scalar_select %p122, %s123, %s124
      %p128 = pneg %p122
      %p129 = scmp.eq.s32.totalorder %s15, 3
      %p130 = por %p128, %p129
      %p131 = scmp.ne.s32.totalorder %s123, %s126
      %p132 = scmp.eq.s32.totalorder %s15, 0
      %p133 = por %p131, %p132
      %p134 = scmp.ne.s32.totalorder %s123, %s126
      %p135 = scmp.eq.s32.totalorder %s20, 3
      %p136 = por %p134, %p135
      %p137 = scmp.ne.s32.totalorder %s126, %s127
      %p138 = scmp.eq.s32.totalorder %s20, 0
      %p139 = por %p137, %p138
      %p140 = scmp.ne.s32.totalorder %s126, %s127
      %p141 = scmp.eq.s32.totalorder %s21, 3
      %p142 = por %p140, %p141
      %p144 = scmp.ne.s32.totalorder %s127, %s143
      %p145 = scmp.eq.s32.totalorder %s21, 0
      %p146 = por %p144, %p145
      %p147 = scmp.le.s32.totalorder 1, %s15
      %p148 = scmp.lt.s32.totalorder %s15, 5
      %p149 = pnand %p147, %p148
      %p150 = pneg %p149
      // Predicated region
      $region9: #{tpu_custom_call.1} parent=5 // pred_check
        _
      $region10: #{tpu_custom_call.1} parent=5 // pred_check_branch
        %152 = sbr.rel (%p149) target = $region12
      $region11: #{tpu_custom_call.1} parent=5 // pred_region
        %s153 = ssub.s32 %s15, 1
        // Predicated region
        $region13: #{tpu_custom_call.1} parent=11 // pred_check
          %p154 = pneg %p48
        $region14: #{tpu_custom_call.1} parent=11 // pred_check_branch
          %156 = sbr.rel (%p154) target = $region16
        $region15: #{tpu_custom_call.1} parent=11 // pred_region
          %s158 = ssub.s32 12288, 12288
          %159 = vsyncadd [#allocation5], %s158
          %s160 = sshll.u32 [#allocation4], 4
          %s161 = int_to_ptr.vmem [resolvable:$true] %s160
          %166 = dma.hbm_to_vmem [thread:$0]  %s1, 12288, %s161, [#allocation5], 128, 128, 8
        $region16: #{tpu_custom_call.1} parent=11 // pred_fallthru
          _
        // Predicated region
        $region17: #{tpu_custom_call.1} parent=11 // pred_check
          %p167 = pneg %p69
        $region18: #{tpu_custom_call.1} parent=11 // pred_check_branch
          %169 = sbr.rel (%p167) target = $region20
        $region19: #{tpu_custom_call.1} parent=11 // pred_region
          _
        $region20: #{tpu_custom_call.1} parent=11 // pred_fallthru
          _
        // Predicated region
        $region21: #{tpu_custom_call.1} parent=11 // pred_check
          %p170 = pneg %p90
        $region22: #{tpu_custom_call.1} parent=11 // pred_check_branch
          %172 = sbr.rel (%p170) target = $region24
        $region23: #{tpu_custom_call.1} parent=11 // pred_region
          _
        $region24: #{tpu_custom_call.1} parent=11 // pred_fallthru
          _
        // Predicated region
        $region25: #{tpu_custom_call.1} parent=11 // pred_check
          %p173 = pneg %p111
        $region26: #{tpu_custom_call.1} parent=11 // pred_check_branch
          %175 = sbr.rel (%p173) target = $region28
        $region27: #{tpu_custom_call.1} parent=11 // pred_region
          _
        $region28: #{tpu_custom_call.1} parent=11 // pred_fallthru
          _
      $region12: #{tpu_custom_call.1} parent=5 // pred_fallthru
        _
      %p176 = scmp.lt.s32.totalorder %s15, 4
      // Predicated region
      $region29: #{tpu_custom_call.1} parent=5 // pred_check
        %p177 = pneg %p176
      $region30: #{tpu_custom_call.1} parent=5 // pred_check_branch
        %179 = sbr.rel (%p177) target = $region32
      $region31: #{tpu_custom_call.1} parent=5 // pred_region
        _
      $region32: #{tpu_custom_call.1} parent=5 // pred_fallthru
        _
      %p180 = scmp.le.s32.totalorder 1, %s15
      %p181 = scmp.lt.s32.totalorder %s15, 5
      %p182 = pnand %p180, %p181
      %p183 = pneg %p182
      // Predicated region
      $region33: #{tpu_custom_call.1} parent=5 // pred_check
        _
      $region34: #{tpu_custom_call.1} parent=5 // pred_check_branch
        %185 = sbr.rel (%p182) target = $region36
      $region35: #{tpu_custom_call.1} parent=5 // pred_region
        %s186 = ssub.s32 %s15, 1
        // Predicated region
        $region37: #{tpu_custom_call.1} parent=35 // pred_check
          %p187 = pneg %p48
        $region38: #{tpu_custom_call.1} parent=35 // pred_check_branch
          %189 = sbr.rel (%p187) target = $region40
        $region39: #{tpu_custom_call.1} parent=35 // pred_region
          %190 = dma.done [#allocation5], 12288
        $region40: #{tpu_custom_call.1} parent=35 // pred_fallthru
          _
        %p191 = pneg %p48
        %p192 = pneg %p45
        %p193 = pneg %p69
        %p194 = pneg %p66
        %p195 = pneg %p90
        %p196 = pneg %p87
        %p197 = pneg %p111
        %p198 = pneg %p108
        %p199 = pneg %p139
        %p200 = pneg %p136
        %s201 = sand.u32 %s126, 1
        %s202 = scalar_lea.sflag [#allocation6], %s201
        %s203 = sand.u32 %s126, 1
        %s204 = smul.addr %s203, 8
        %s205 = scalar_lea.vmem [#allocation7], %s204
        %s206 = smul.u32 %s25, 8
        %s207 = smul.u32 %s24, 24
        %s208 = sadd.s32 %s206, %s207
        %s209 = smul.addr %s208, 16
        %s210 = scalar_lea.hbm %s0, %s209
        // Predicated region
        $region41: #{tpu_custom_call.1} parent=35 // pred_check
          _
        $region42: #{tpu_custom_call.1} parent=35 // pred_check_branch
          %212 = sbr.rel target = $region44
        $region43: #{tpu_custom_call.1} parent=35 // pred_region
          %213 = sst [smem:[#allocation10]] [#allocation9]
          %214 = sst [smem:[#allocation11]] [#allocation8]
        $region44: #{tpu_custom_call.1} parent=35 // pred_fallthru
          _
        %216 = shalt.err (0)
        %s218 = sshll.u32 [#allocation2], 4
        %s219 = int_to_ptr.vmem [resolvable:$true] %s218
        %221 = dma.hbm_to_vmem [thread:$0]  %s210, 256, %s219, [#allocation3]
        %s222 = smul.u32 16, 1
        %s223 = sshll.u32 %s222, 4
        %224 = dma.done [#allocation3], %s223
        %v225 = vld [vmem:[#allocation2] sm:$0xff]
        %v226 = vld [vmem:[#allocation2 + $0x8] sm:$0xff]
        %v227 = vmax.f32 %v225, 0.0
        %v228 = vmax.f32 %v226, 0.0
        %vm231 = vcmask 1046528
        %v232 = vrot.slane %v227, 1
        %v233 = vrot.slane %v228, 1
        %v234 = vsel %vm231, %v232, %v233
        %vm237 = vcmask 1045504
        %v238 = vrot.slane %v227, 2
        %v239 = vrot.slane %v228, 2
        %v240 = vsel %vm237, %v238, %v239
        %v243 = vld [vmem:[#allocation4] sm:$0xff]
        %v244 = vld [vmem:[#allocation4 + $0x8] sm:$0xff]
        %v245 = vld [vmem:[#allocation4 + $0x10] sm:$0xff]
        %v246 = vld [vmem:[#allocation4 + $0x18] sm:$0xff]
        %v247 = vld [vmem:[#allocation4 + $0x20] sm:$0xff]
        %v248 = vld [vmem:[#allocation4 + $0x28] sm:$0xff]
        %v249 = vld [vmem:[#allocation4 + $0x30] sm:$0xff]
        %v250 = vld [vmem:[#allocation4 + $0x38] sm:$0xff]
        %v251 = vld [vmem:[#allocation4 + $0x40] sm:$0xff]
        %v252 = vld [vmem:[#allocation4 + $0x48] sm:$0xff]
        %v253 = vld [vmem:[#allocation4 + $0x50] sm:$0xff]
        %v254 = vld [vmem:[#allocation4 + $0x58] sm:$0xff]
        %v255 = vld [vmem:[#allocation4 + $0x60] sm:$0xff]
        %v256 = vld [vmem:[#allocation4 + $0x68] sm:$0xff]
        %v257 = vld [vmem:[#allocation4 + $0x70] sm:$0xff]
        %v258 = vld [vmem:[#allocation4 + $0x78] sm:$0xff]
        %v259 = vld [vmem:[#allocation4 + $0x80] sm:$0xff]
        %v260 = vld [vmem:[#allocation4 + $0x88] sm:$0xff]
        %v261 = vld [vmem:[#allocation4 + $0x90] sm:$0xff]
        %v262 = vld [vmem:[#allocation4 + $0x98] sm:$0xff]
        %v263 = vld [vmem:[#allocation4 + $0xa0] sm:$0xff]
        %v264 = vld [vmem:[#allocation4 + $0xa8] sm:$0xff]
        %v265 = vld [vmem:[#allocation4 + $0xb0] sm:$0xff]
        %v266 = vld [vmem:[#allocation4 + $0xb8] sm:$0xff]
        %v267 = vld [vmem:[#allocation4 + $0xc0] sm:$0xff]
        %v268 = vld [vmem:[#allocation4 + $0xc8] sm:$0xff]
        %v269 = vld [vmem:[#allocation4 + $0xd0] sm:$0xff]
        %v270 = vld [vmem:[#allocation4 + $0xd8] sm:$0xff]
        %v271 = vld [vmem:[#allocation4 + $0xe0] sm:$0xff]
        %v272 = vld [vmem:[#allocation4 + $0xe8] sm:$0xff]
        %v273 = vld [vmem:[#allocation4 + $0xf0] sm:$0xff]
        %v274 = vld [vmem:[#allocation4 + $0xf8] sm:$0xff]
        %v275 = vld [vmem:[#allocation4 + $0x100] sm:$0xff]
        %v276 = vld [vmem:[#allocation4 + $0x108] sm:$0xff]
        %v277 = vld [vmem:[#allocation4 + $0x110] sm:$0xff]
        %v278 = vld [vmem:[#allocation4 + $0x118] sm:$0xff]
        %v279 = vld [vmem:[#allocation4 + $0x120] sm:$0xff]
        %v280 = vld [vmem:[#allocation4 + $0x128] sm:$0xff]
        %v281 = vld [vmem:[#allocation4 + $0x130] sm:$0xff]
        %v282 = vld [vmem:[#allocation4 + $0x138] sm:$0xff]
        %v283 = vld [vmem:[#allocation4 + $0x140] sm:$0xff]
        %v284 = vld [vmem:[#allocation4 + $0x148] sm:$0xff]
        %v285 = vld [vmem:[#allocation4 + $0x150] sm:$0xff]
        %v286 = vld [vmem:[#allocation4 + $0x158] sm:$0xff]
        %v287 = vld [vmem:[#allocation4 + $0x160] sm:$0xff]
        %v288 = vld [vmem:[#allocation4 + $0x168] sm:$0xff]
        %v289 = vld [vmem:[#allocation4 + $0x170] sm:$0xff]
        %v290 = vld [vmem:[#allocation4 + $0x178] sm:$0xff]
        %v291 = vld [vmem:[%s2] sm:$0x1]
        %v293 = vlaneseq
        %v294 = vshrl.u32 %v293, 7
        %v295 = vsub.s32 0, %v294
        %v296 = vrot.slane %v291, %v295
        %298 = vmatprep.subr.mxu0 0.0
        %299 = vmatpush1.msra.mxu0 %v243
        %300 = vmatprep.subr.mxu0 0.0
        %301 = vmatpush1.msra.mxu0 %v244
        %302 = vmatprep.subr.mxu0 0.0
        %303 = vmatpush1.msra.mxu0 %v245
        %304 = vmatprep.subr.mxu0 0.0
        %305 = vmatpush1.msra.mxu0 %v246
        %306 = vmatprep.subr.mxu0 0.0
        %307 = vmatpush1.msra.mxu0 %v247
        %308 = vmatprep.subr.mxu0 0.0
        %309 = vmatpush1.msra.mxu0 %v248
        %310 = vmatprep.subr.mxu0 0.0
        %311 = vmatpush1.msra.mxu0 %v249
        %312 = vmatprep.subr.mxu0 0.0
        %313 = vmatpush1.msra.mxu0 %v250
        %314 = vmatprep.subr.mxu0 0.0
        %315 = vmatpush1.msra.mxu0 %v251
        %316 = vmatprep.subr.mxu0 0.0
        %317 = vmatpush1.msra.mxu0 %v252
        %318 = vmatprep.subr.mxu0 0.0
        %319 = vmatpush1.msra.mxu0 %v253
        %320 = vmatprep.subr.mxu0 0.0
        %321 = vmatpush1.msra.mxu0 %v254
        %322 = vmatprep.subr.mxu0 0.0
        %323 = vmatpush1.msra.mxu0 %v255
        %324 = vmatprep.subr.mxu0 0.0
        %325 = vmatpush1.msra.mxu0 %v256
        %326 = vmatprep.subr.mxu0 0.0
        %327 = vmatpush1.msra.mxu0 %v257
        %328 = vmatprep.subr.mxu0 0.0
        %329 = vmatpush1.msra.mxu0 %v258
        %330 = vmatprep.subr.mxu0 0.0
        %331 = vmatpush1.msra.mxu0 %v259
        %332 = vmatprep.subr.mxu0 0.0
        %333 = vmatpush1.msra.mxu0 %v260
        %334 = vmatprep.subr.mxu0 0.0
        %335 = vmatpush1.msra.mxu0 %v261
        %336 = vmatprep.subr.mxu0 0.0
        %337 = vmatpush1.msra.mxu0 %v262
        %338 = vmatprep.subr.mxu0 0.0
        %339 = vmatpush1.msra.mxu0 %v263
        %340 = vmatprep.subr.mxu0 0.0
        %341 = vmatpush1.msra.mxu0 %v264
        %342 = vmatprep.subr.mxu0 0.0
        %343 = vmatpush1.msra.mxu0 %v265
        %344 = vmatprep.subr.mxu0 0.0
        %345 = vmatpush1.msra.mxu0 %v266
        %346 = vmatprep.subr.mxu0 0.0
        %347 = vmatpush1.msra.mxu0 %v267
        %348 = vmatprep.subr.mxu0 0.0
        %349 = vmatpush1.msra.mxu0 %v268
        %350 = vmatprep.subr.mxu0 0.0
        %351 = vmatpush1.msra.mxu0 %v269
        %352 = vmatprep.subr.mxu0 0.0
        %353 = vmatpush1.msra.mxu0 %v270
        %354 = vmatprep.subr.mxu0 0.0
        %355 = vmatpush1.msra.mxu0 %v271
        %356 = vmatprep.subr.mxu0 0.0
        %357 = vmatpush1.msra.mxu0 %v272
        %358 = vmatprep.subr.mxu0 0.0
        %359 = vmatpush1.msra.mxu0 %v273
        %360 = vmatprep.subr.mxu0 0.0
        %361 = vmatpush1.msra.mxu0 %v274
        %362 = vmatprep.mubr.f32.mxu0 %v234
        %363 = vmatmul.mubr.f32.gmra.mrb[0].mxu0 %v227
        %v364 = vpop.f32.mrb[0].mxu0
        %v365 = vadd.f32 %v296, %v364
        %v366 = vpop.f32.mrb[0].mxu0
        %367 = vmatprep.mubr.f32.mxu0 %v233
        %368 = vmatmul.mubr.f32.gmra.mrb[0].mxu0 %v228
        %v369 = vpop.f32.mrb[0].mxu0
        %v370 = vadd.f32 %v296, %v369
        %v371 = vpop.f32.mrb[0].mxu0
        %372 = vdwg.mxu0
        %373 = vmatprep.subr.mxu0 0.0
        %374 = vmatpush1.msra.mxu0 %v275
        %375 = vmatprep.subr.mxu0 0.0
        %376 = vmatpush1.msra.mxu0 %v276
        %377 = vmatprep.subr.mxu0 0.0
        %378 = vmatpush1.msra.mxu0 %v277
        %379 = vmatprep.subr.mxu0 0.0
        %380 = vmatpush1.msra.mxu0 %v278
        %381 = vmatprep.subr.mxu0 0.0
        %382 = vmatpush1.msra.mxu0 %v279
        %383 = vmatprep.subr.mxu0 0.0
        %384 = vmatpush1.msra.mxu0 %v280
        %385 = vmatprep.subr.mxu0 0.0
        %386 = vmatpush1.msra.mxu0 %v281
        %387 = vmatprep.subr.mxu0 0.0
        %388 = vmatpush1.msra.mxu0 %v282
        %389 = vmatprep.subr.mxu0 0.0
        %390 = vmatpush1.msra.mxu0 %v283
        %391 = vmatprep.subr.mxu0 0.0
        %392 = vmatpush1.msra.mxu0 %v284
        %393 = vmatprep.subr.mxu0 0.0
        %394 = vmatpush1.msra.mxu0 %v285
        %395 = vmatprep.subr.mxu0 0.0
        %396 = vmatpush1.msra.mxu0 %v286
        %397 = vmatprep.subr.mxu0 0.0
        %398 = vmatpush1.msra.mxu0 %v287
        %399 = vmatprep.subr.mxu0 0.0
        %400 = vmatpush1.msra.mxu0 %v288
        %401 = vmatprep.subr.mxu0 0.0
        %402 = vmatpush1.msra.mxu0 %v289
        %403 = vmatprep.subr.mxu0 0.0
        %404 = vmatpush1.msra.mxu0 %v290
        %405 = vmatprep.subr.mxu0 0.0
        %406 = vmatpush1.msra.mxu0 0.0
        %407 = vmatprep.subr.mxu0 0.0
        %408 = vmatpush1.msra.mxu0 0.0
        %409 = vmatprep.subr.mxu0 0.0
        %410 = vmatpush1.msra.mxu0 0.0
        %411 = vmatprep.subr.mxu0 0.0
        %412 = vmatpush1.msra.mxu0 0.0
        %413 = vmatprep.subr.mxu0 0.0
        %414 = vmatpush1.msra.mxu0 0.0
        %415 = vmatprep.subr.mxu0 0.0
        %416 = vmatpush1.msra.mxu0 0.0
        %417 = vmatprep.subr.mxu0 0.0
        %418 = vmatpush1.msra.mxu0 0.0
        %419 = vmatprep.subr.mxu0 0.0
        %420 = vmatpush1.msra.mxu0 0.0
        %421 = vmatprep.subr.mxu0 0.0
        %422 = vmatpush1.msra.mxu0 0.0
        %423 = vmatprep.subr.mxu0 0.0
        %424 = vmatpush1.msra.mxu0 0.0
        %425 = vmatprep.subr.mxu0 0.0
        %426 = vmatpush1.msra.mxu0 0.0
        %427 = vmatprep.subr.mxu0 0.0
        %428 = vmatpush1.msra.mxu0 0.0
        %429 = vmatprep.subr.mxu0 0.0
        %430 = vmatpush1.msra.mxu0 0.0
        %431 = vmatprep.subr.mxu0 0.0
        %432 = vmatpush1.msra.mxu0 0.0
        %433 = vmatprep.subr.mxu0 0.0
        %434 = vmatpush1.msra.mxu0 0.0
        %435 = vmatprep.subr.mxu0 0.0
        %436 = vmatpush1.msra.mxu0 0.0
        %437 = vmatprep.mubr.f32.mxu0 0.0
        %438 = vmatmul.mubr.f32.gmra.mrb[0].mxu0 %v240
        %v439 = vpop.f32.mrb[0].mxu0
        %v440 = vadd.f32 %v365, %v439
        %v441 = vpop.f32.mrb[0].mxu0
        %442 = vmatprep.mubr.f32.mxu0 0.0
        %443 = vmatmul.mubr.f32.gmra.mrb[0].mxu0 %v239
        %v444 = vpop.f32.mrb[0].mxu0
        %v445 = vadd.f32 %v370, %v444
        %v446 = vpop.f32.mrb[0].mxu0
        %447 = vdwg.mxu0
        %448 = vadd.xlane.f32.xlu0 %v440
        %v449 = vpop.xlane.xlu0 %448
        %vm450 = vcmask 1041408
        %v451 = vsel %vm450, %v445, 0.0
        %452 = vadd.xlane.f32.xlu0 %v451
        %v453 = vpop.xlane.xlu0 %452
        %v454 = vmul.f32 %v440, %v440
        %v455 = vmul.f32 %v445, %v445
        %456 = vadd.xlane.f32.xlu0 %v454
        %v457 = vpop.xlane.xlu0 %456
        %v458 = vsel %vm450, %v455, 0.0
        %459 = vadd.xlane.f32.xlu0 %v458
        %v460 = vpop.xlane.xlu0 %459
        %v461 = vmul.f32 %v449, 0.03125
        %v462 = vmul.f32 %v453, 0.03125
        %v463 = vmul.f32 %v457, 0.03125
        %v464 = vmul.f32 %v460, 0.03125
        %v465 = vmul.f32 %v461, %v461
        %v466 = vmul.f32 %v462, %v462
        %v467 = vsub.f32 %v463, %v465
        %v468 = vsub.f32 %v464, %v466
        %v469 = vmax.f32 %v467, 0.0
        %v470 = vmax.f32 %v468, 0.0
        %v471 = vsub.f32 %v440, %v461
        %v472 = vsub.f32 %v445, %v462
        %v473 = vadd.f32 %v469, 1e-05
        %v474 = vadd.f32 %v470, 1e-05
        %v475 = vrsqrt.pop %v473
        %v476 = vrsqrt.pop %v474
        %v477 = vmul.f32 %v471, %v475
        %v478 = vmul.f32 %v472, %v476
        %v479 = vld [vmem:[%s3] sm:$0x1]
        %v481 = vlaneseq
        %v482 = vshrl.u32 %v481, 7
        %v483 = vsub.s32 0, %v482
        %v484 = vrot.slane %v479, %v483
        %v486 = vmul.f32 %v477, %v484
        %v487 = vmul.f32 %v478, %v484
        %v488 = vld [vmem:[%s4] sm:$0x1]
        %v490 = vlaneseq
        %v491 = vshrl.u32 %v490, 7
        %v492 = vsub.s32 0, %v491
        %v493 = vrot.slane %v488, %v492
        %v495 = vadd.f32 %v486, %v493
        %v496 = vadd.f32 %v487, %v493
        %v497 = vmax.f32 %v495, 0.0
        %v498 = vmax.f32 %v496, 0.0
        %v499 = vlaneseq
        %v500 = vshrl.u32 %v499, 7
        %v501 = vadd.s32 %v500, 8
        %s502 = sadd.s32 %s206, 4294967295
        %v503 = vstv %s502
        %v504 = vadd.s32 %v500, %v503
        %v505 = vadd.s32 %v501, %v503
        %vm506 = vcmp.ge.s32.totalorder %v504, 0
        %vm507 = vcmp.ge.s32.totalorder %v505, 0
        %vm508 = vcmp.lt.s32.totalorder %v504, 16
        %vm509 = vcmp.lt.s32.totalorder %v505, 16
        %vm510 = vmand %vm506, %vm508
        %vm511 = vmand %vm507, %vm509
        %v512 = vsel %vm510, 1, 0
        %v513 = vsel %vm511, 1, 0
        %vm514 = vcmp.eq.s32.totalorder %v512, 1
        %vm515 = vcmp.eq.s32.totalorder %v513, 1
        %v516 = vsel %vm514, %v497, 0.0
        %v517 = vsel %vm515, %v498, 0.0
        %v520 = vrot.slane %v516, 1
        %v521 = vrot.slane %v517, 1
        %v522 = vsel %vm231, %v520, %v521
        %v524 = vrot.slane %v516, 2
        %v525 = vrot.slane %v517, 2
        %v526 = vsel %vm237, %v524, %v525
        %s528 = scalar_lea.vmem [#allocation4], 384
        %v529 = vld [vmem:[%s528] sm:$0xff]
        %v530 = vld [vmem:[%s528 + $0x8] sm:$0xff]
        %v531 = vld [vmem:[%s528 + $0x10] sm:$0xff]
        %v532 = vld [vmem:[%s528 + $0x18] sm:$0xff]
        %v533 = vld [vmem:[%s528 + $0x20] sm:$0xff]
        %v534 = vld [vmem:[%s528 + $0x28] sm:$0xff]
        %v535 = vld [vmem:[%s528 + $0x30] sm:$0xff]
        %v536 = vld [vmem:[%s528 + $0x38] sm:$0xff]
        %v537 = vld [vmem:[%s528 + $0x40] sm:$0xff]
        %v538 = vld [vmem:[%s528 + $0x48] sm:$0xff]
        %v539 = vld [vmem:[%s528 + $0x50] sm:$0xff]
        %v540 = vld [vmem:[%s528 + $0x58] sm:$0xff]
        %v541 = vld [vmem:[%s528 + $0x60] sm:$0xff]
        %v542 = vld [vmem:[%s528 + $0x68] sm:$0xff]
        %v543 = vld [vmem:[%s528 + $0x70] sm:$0xff]
        %v544 = vld [vmem:[%s528 + $0x78] sm:$0xff]
        %v545 = vld [vmem:[%s528 + $0x80] sm:$0xff]
        %v546 = vld [vmem:[%s528 + $0x88] sm:$0xff]
        %v547 = vld [vmem:[%s528 + $0x90] sm:$0xff]
        %v548 = vld [vmem:[%s528 + $0x98] sm:$0xff]
        %v549 = vld [vmem:[%s528 + $0xa0] sm:$0xff]
        %v550 = vld [vmem:[%s528 + $0xa8] sm:$0xff]
        %v551 = vld [vmem:[%s528 + $0xb0] sm:$0xff]
        %v552 = vld [vmem:[%s528 + $0xb8] sm:$0xff]
        %v553 = vld [vmem:[%s528 + $0xc0] sm:$0xff]
        %v554 = vld [vmem:[%s528 + $0xc8] sm:$0xff]
        %v555 = vld [vmem:[%s528 + $0xd0] sm:$0xff]
        %v556 = vld [vmem:[%s528 + $0xd8] sm:$0xff]
        %v557 = vld [vmem:[%s528 + $0xe0] sm:$0xff]
        %v558 = vld [vmem:[%s528 + $0xe8] sm:$0xff]
        %v559 = vld [vmem:[%s528 + $0xf0] sm:$0xff]
        %v560 = vld [vmem:[%s528 + $0xf8] sm:$0xff]
        %v561 = vld [vmem:[%s528 + $0x100] sm:$0xff]
        %v562 = vld [vmem:[%s528 + $0x108] sm:$0xff]
        %v563 = vld [vmem:[%s528 + $0x110] sm:$0xff]
        %v564 = vld [vmem:[%s528 + $0x118] sm:$0xff]
        %v565 = vld [vmem:[%s528 + $0x120] sm:$0xff]
        %v566 = vld [vmem:[%s528 + $0x128] sm:$0xff]
        %v567 = vld [vmem:[%s528 + $0x130] sm:$0xff]
        %v568 = vld [vmem:[%s528 + $0x138] sm:$0xff]
        %v569 = vld [vmem:[%s528 + $0x140] sm:$0xff]
        %v570 = vld [vmem:[%s528 + $0x148] sm:$0xff]
        %v571 = vld [vmem:[%s528 + $0x150] sm:$0xff]
        %v572 = vld [vmem:[%s528 + $0x158] sm:$0xff]
        %v573 = vld [vmem:[%s528 + $0x160] sm:$0xff]
        %v574 = vld [vmem:[%s528 + $0x168] sm:$0xff]
        %v575 = vld [vmem:[%s528 + $0x170] sm:$0xff]
        %v576 = vld [vmem:[%s528 + $0x178] sm:$0xff]
        %s577 = scalar_lea.vmem %s2, 1
        %v578 = vld [vmem:[%s577] sm:$0x1]
        %v580 = vlaneseq
        %v581 = vshrl.u32 %v580, 7
        %v582 = vsub.s32 0, %v581
        %v583 = vrot.slane %v578, %v582
        %585 = vmatprep.subr.mxu0 0.0
        %586 = vmatpush1.msra.mxu0 %v529
        %587 = vmatprep.subr.mxu0 0.0
        %588 = vmatpush1.msra.mxu0 %v530
        %589 = vmatprep.subr.mxu0 0.0
        %590 = vmatpush1.msra.mxu0 %v531
        %591 = vmatprep.subr.mxu0 0.0
        %592 = vmatpush1.msra.mxu0 %v532
        %593 = vmatprep.subr.mxu0 0.0
        %594 = vmatpush1.msra.mxu0 %v533
        %595 = vmatprep.subr.mxu0 0.0
        %596 = vmatpush1.msra.mxu0 %v534
        %597 = vmatprep.subr.mxu0 0.0
        %598 = vmatpush1.msra.mxu0 %v535
        %599 = vmatprep.subr.mxu0 0.0
        %600 = vmatpush1.msra.mxu0 %v536
        %601 = vmatprep.subr.mxu0 0.0
        %602 = vmatpush1.msra.mxu0 %v537
        %603 = vmatprep.subr.mxu0 0.0
        %604 = vmatpush1.msra.mxu0 %v538
        %605 = vmatprep.subr.mxu0 0.0
        %606 = vmatpush1.msra.mxu0 %v539
        %607 = vmatprep.subr.mxu0 0.0
        %608 = vmatpush1.msra.mxu0 %v540
        %609 = vmatprep.subr.mxu0 0.0
        %610 = vmatpush1.msra.mxu0 %v541
        %611 = vmatprep.subr.mxu0 0.0
        %612 = vmatpush1.msra.mxu0 %v542
        %613 = vmatprep.subr.mxu0 0.0
        %614 = vmatpush1.msra.mxu0 %v543
        %615 = vmatprep.subr.mxu0 0.0
        %616 = vmatpush1.msra.mxu0 %v544
        %617 = vmatprep.subr.mxu0 0.0
        %618 = vmatpush1.msra.mxu0 %v545
        %619 = vmatprep.subr.mxu0 0.0
        %620 = vmatpush1.msra.mxu0 %v546
        %621 = vmatprep.subr.mxu0 0.0
        %622 = vmatpush1.msra.mxu0 %v547
        %623 = vmatprep.subr.mxu0 0.0
        %624 = vmatpush1.msra.mxu0 %v548
        %625 = vmatprep.subr.mxu0 0.0
        %626 = vmatpush1.msra.mxu0 %v549
        %627 = vmatprep.subr.mxu0 0.0
        %628 = vmatpush1.msra.mxu0 %v550
        %629 = vmatprep.subr.mxu0 0.0
        %630 = vmatpush1.msra.mxu0 %v551
        %631 = vmatprep.subr.mxu0 0.0
        %632 = vmatpush1.msra.mxu0 %v552
        %633 = vmatprep.subr.mxu0 0.0
        %634 = vmatpush1.msra.mxu0 %v553
        %635 = vmatprep.subr.mxu0 0.0
        %636 = vmatpush1.msra.mxu0 %v554
        %637 = vmatprep.subr.mxu0 0.0
        %638 = vmatpush1.msra.mxu0 %v555
        %639 = vmatprep.subr.mxu0 0.0
        %640 = vmatpush1.msra.mxu0 %v556
        %641 = vmatprep.subr.mxu0 0.0
        %642 = vmatpush1.msra.mxu0 %v557
        %643 = vmatprep.subr.mxu0 0.0
        %644 = vmatpush1.msra.mxu0 %v558
        %645 = vmatprep.subr.mxu0 0.0
        %646 = vmatpush1.msra.mxu0 %v559
        %647 = vmatprep.subr.mxu0 0.0
        %648 = vmatpush1.msra.mxu0 %v560
        %649 = vmatprep.mubr.f32.mxu0 %v522
        %650 = vmatmul.mubr.f32.gmra.mrb[0].mxu0 %v516
        %v651 = vpop.f32.mrb[0].mxu0
        %v652 = vadd.f32 %v583, %v651
        %v653 = vpop.f32.mrb[0].mxu0
        %654 = vdwg.mxu0
        %655 = vmatprep.subr.mxu0 0.0
        %656 = vmatpush1.msra.mxu0 %v561
        %657 = vmatprep.subr.mxu0 0.0
        %658 = vmatpush1.msra.mxu0 %v562
        %659 = vmatprep.subr.mxu0 0.0
        %660 = vmatpush1.msra.mxu0 %v563
        %661 = vmatprep.subr.mxu0 0.0
        %662 = vmatpush1.msra.mxu0 %v564
        %663 = vmatprep.subr.mxu0 0.0
        %664 = vmatpush1.msra.mxu0 %v565
        %665 = vmatprep.subr.mxu0 0.0
        %666 = vmatpush1.msra.mxu0 %v566
        %667 = vmatprep.subr.mxu0 0.0
        %668 = vmatpush1.msra.mxu0 %v567
        %669 = vmatprep.subr.mxu0 0.0
        %670 = vmatpush1.msra.mxu0 %v568
        %671 = vmatprep.subr.mxu0 0.0
        %672 = vmatpush1.msra.mxu0 %v569
        %673 = vmatprep.subr.mxu0 0.0
        %674 = vmatpush1.msra.mxu0 %v570
        %675 = vmatprep.subr.mxu0 0.0
        %676 = vmatpush1.msra.mxu0 %v571
        %677 = vmatprep.subr.mxu0 0.0
        %678 = vmatpush1.msra.mxu0 %v572
        %679 = vmatprep.subr.mxu0 0.0
        %680 = vmatpush1.msra.mxu0 %v573
        %681 = vmatprep.subr.mxu0 0.0
        %682 = vmatpush1.msra.mxu0 %v574
        %683 = vmatprep.subr.mxu0 0.0
        %684 = vmatpush1.msra.mxu0 %v575
        %685 = vmatprep.subr.mxu0 0.0
        %686 = vmatpush1.msra.mxu0 %v576
        %687 = vmatprep.subr.mxu0 0.0
        %688 = vmatpush1.msra.mxu0 0.0
        %689 = vmatprep.subr.mxu0 0.0
        %690 = vmatpush1.msra.mxu0 0.0
        %691 = vmatprep.subr.mxu0 0.0
        %692 = vmatpush1.msra.mxu0 0.0
        %693 = vmatprep.subr.mxu0 0.0
        %694 = vmatpush1.msra.mxu0 0.0
        %695 = vmatprep.subr.mxu0 0.0
        %696 = vmatpush1.msra.mxu0 0.0
        %697 = vmatprep.subr.mxu0 0.0
        %698 = vmatpush1.msra.mxu0 0.0
        %699 = vmatprep.subr.mxu0 0.0
        %700 = vmatpush1.msra.mxu0 0.0
        %701 = vmatprep.subr.mxu0 0.0
        %702 = vmatpush1.msra.mxu0 0.0
        %703 = vmatprep.subr.mxu0 0.0
        %704 = vmatpush1.msra.mxu0 0.0
        %705 = vmatprep.subr.mxu0 0.0
        %706 = vmatpush1.msra.mxu0 0.0
        %707 = vmatprep.subr.mxu0 0.0
        %708 = vmatpush1.msra.mxu0 0.0
        %709 = vmatprep.subr.mxu0 0.0
        %710 = vmatpush1.msra.mxu0 0.0
        %711 = vmatprep.subr.mxu0 0.0
        %712 = vmatpush1.msra.mxu0 0.0
        %713 = vmatprep.subr.mxu0 0.0
        %714 = vmatpush1.msra.mxu0 0.0
        %715 = vmatprep.subr.mxu0 0.0
        %716 = vmatpush1.msra.mxu0 0.0
        %717 = vmatprep.subr.mxu0 0.0
        %718 = vmatpush1.msra.mxu0 0.0
        %719 = vmatprep.mubr.f32.mxu0 0.0
        %720 = vmatmul.mubr.f32.gmra.mrb[0].mxu0 %v526
        %v721 = vpop.f32.mrb[0].mxu0
        %v722 = vadd.f32 %v652, %v721
        %v723 = vpop.f32.mrb[0].mxu0
        %724 = vdwg.mxu0
        %725 = vadd.xlane.f32.xlu0 %v722
        %v726 = vpop.xlane.xlu0 %725
        %v727 = vmul.f32 %v722, %v722
        %728 = vadd.xlane.f32.xlu0 %v727
        %v729 = vpop.xlane.xlu0 %728
        %v730 = vmul.f32 %v726, 0.03125
        %v731 = vmul.f32 %v729, 0.03125
        %v732 = vmul.f32 %v730, %v730
        %v733 = vsub.f32 %v731, %v732
        %v734 = vmax.f32 %v733, 0.0
        %v735 = vsub.f32 %v722, %v730
        %v736 = vadd.f32 %v734, 1e-05
        %v737 = vrsqrt.pop %v736
        %v738 = vmul.f32 %v735, %v737
        %s739 = scalar_lea.vmem %s3, 1
        %v740 = vld [vmem:[%s739] sm:$0x1]
        %v742 = vlaneseq
        %v743 = vshrl.u32 %v742, 7
        %v744 = vsub.s32 0, %v743
        %v745 = vrot.slane %v740, %v744
        %v747 = vmul.f32 %v738, %v745
        %s748 = scalar_lea.vmem %s4, 1
        %v749 = vld [vmem:[%s748] sm:$0x1]
        %v751 = vlaneseq
        %v752 = vshrl.u32 %v751, 7
        %v753 = vsub.s32 0, %v752
        %v754 = vrot.slane %v749, %v753
        %v756 = vadd.f32 %v747, %v754
        %757 = vst [vmem:[%s205] sm:$0xff] %v756
        %s758 = sand.u32 %s126, 1
        %s759 = scalar_lea.sflag [#allocation6], %s758
        %s760 = sand.u32 %s126, 1
        %s761 = smul.addr %s760, 8
        %s762 = scalar_lea.vmem [#allocation7], %s761
        // Predicated region
        $region45: #{tpu_custom_call.1} parent=35 // pred_check
          %p763 = pneg %p136
        $region46: #{tpu_custom_call.1} parent=35 // pred_check_branch
          %765 = sbr.rel (%p763) target = $region48
        $region47: #{tpu_custom_call.1} parent=35 // pred_region
          %s767 = ssub.s32 128, 128
          %768 = vsyncadd %s759, %s767
          %s769 = smul.addr %s24, 2
          %s770 = sadd.s32 %s25, %s769
          %s771 = smul.addr %s770, 128
          %s772 = scalar_lea.hbm %s5, %s771
          %s774 = sshll.u32 %s762, 4
          %s775 = int_to_ptr.vmem [resolvable:$true] %s774
          %777 = dma.vmem_to_hbm [thread:$0]  %s775, 128, %s772, %s759
        $region48: #{tpu_custom_call.1} parent=35 // pred_fallthru
          _
      $region36: #{tpu_custom_call.1} parent=5 // pred_fallthru
        _
      %p778 = scmp.le.s32.totalorder 2, %s15
      // Predicated region
      $region49: #{tpu_custom_call.1} parent=5 // pred_check
        %p779 = pneg %p778
      $region50: #{tpu_custom_call.1} parent=5 // pred_check_branch
        %781 = sbr.rel (%p779) target = $region52
      $region51: #{tpu_custom_call.1} parent=5 // pred_region
        %s782 = ssub.s32 %s15, 2
        // Predicated region
        $region53: #{tpu_custom_call.1} parent=51 // pred_check
          %p783 = pneg %p142
        $region54: #{tpu_custom_call.1} parent=51 // pred_check_branch
          %785 = sbr.rel (%p783) target = $region56
        $region55: #{tpu_custom_call.1} parent=51 // pred_region
          %s786 = sand.u32 %s127, 1
          %s787 = scalar_lea.sflag [#allocation6], %s786
          %s788 = sand.u32 %s127, 1
          %s789 = smul.addr %s788, 8
          %s790 = scalar_lea.vmem [#allocation7], %s789
          %791 = dma.done %s787, 128
        $region56: #{tpu_custom_call.1} parent=51 // pred_fallthru
          _
      $region52: #{tpu_custom_call.1} parent=5 // pred_fallthru
        _
    $region6: #{tpu_custom_call.1} parent=1 // loop_footer
      %s19 = sadd.s32 1, %s15
    $region7: #{tpu_custom_call.1} parent=1 // loop_footer_branch
      %14 = sbr.rel target = $region3
    $region8: #{tpu_custom_call.1} parent=1 // loop_exit
      _
    %792 = vsyncpa [#allocation5], 1
    %s793 = scalar_lea.sflag [#allocation5], 1
    %794 = vsyncpa %s793, 1
    %795 = vsyncpa [#allocation6], 1
    %s796 = scalar_lea.sflag [#allocation6], 1
    %797 = vsyncpa %s796, 1
  %798 = vsyncmov [#allocation3]
  %s799 = vpop.sfrf %798
  %p800 = scmp.eq.s32.totalorder %s799, 0
  %p801 = pneg %p800
  %803 = shalt.err (%p801)

</llo_original>
